<compile_context>
chip_gen: v7x
topology: tpu7x:2x2x1
jax: 0.10.0
libtpu: 0.0.40
codegen_flags: <defaults>
</compile_context>

<pallas_src>
import functools

import jax
import jax.numpy as jnp
from jax.experimental import pallas as pl
from jax.experimental.pallas import tpu as pltpu

IN_F = 28 * 28      # 784 real input features
K_PAD = 896         # 7 * 128, padded input features
H_PAD = 128         # padded hidden width (real width 64)
OUT_PAD = 128       # padded class lanes (real classes 10)
N_CLASSES = 10


def mlp_kernel(x_ref,
               w1_ref, b1_ref,
               w2_ref, b2_ref,
               w3_ref, b3_ref,
               w4_ref, b4_ref,
               o_ref):
    x = x_ref[...]                                            # (tb, 896) bf16

    # fc1 + relu (f32 accumulate / elementwise, bf16 back into the MXU)
    h = jnp.dot(x, w1_ref[...], preferred_element_type=jnp.float32) + b1_ref[...]
    h = jnp.maximum(h, 0.0).astype(jnp.bfloat16)

    # fc2 + relu
    h = jnp.dot(h, w2_ref[...], preferred_element_type=jnp.float32) + b2_ref[...]
    h = jnp.maximum(h, 0.0).astype(jnp.bfloat16)

    # fc3 + relu
    h = jnp.dot(h, w3_ref[...], preferred_element_type=jnp.float32) + b3_ref[...]
    h = jnp.maximum(h, 0.0).astype(jnp.bfloat16)

    # fc4 (logits): (tb, 128) f32, only lanes [0, 10) are real classes.
    logits = jnp.dot(h, w4_ref[...], preferred_element_type=jnp.float32) + b4_ref[...]

    # log_softmax over the 10 real classes, numerically stable, lane-dense store.
    lane = jax.lax.broadcasted_iota(jnp.int32, logits.shape, dimension=1)
    valid = lane < N_CLASSES
    masked = jnp.where(valid, logits, jnp.float32(-1e30))
    m = jnp.max(masked, axis=1, keepdims=True)
    e = jnp.where(valid, jnp.exp(logits - m), 0.0)
    lse = jnp.log(jnp.sum(e, axis=1, keepdims=True))
    out = jnp.where(valid, logits - m - lse, 0.0)
    o_ref[...] = out.astype(o_ref.dtype)


def _round_up(n, m):
    return ((n + m - 1) // m) * m


@functools.partial(jax.jit, static_argnames=("tile_b",))
def neural_net_forward(x, params, tile_b=1024):
    """x: (B, 784) float32.  params: dict of (in,out) weights and (1,out) biases."""
    B = x.shape[0]

    # Effective batch tile: multiple of 8 sublanes, no larger than needed.
    tb = _round_up(min(tile_b, _round_up(B, 8)), 8)
    Bp = _round_up(B, tb)

    # Pad + cast activations: (B, 784) f32 -> (Bp, 896) bf16.
    xp = jnp.zeros((Bp, K_PAD), jnp.bfloat16)
    xp = xp.at[:B, :IN_F].set(x.astype(jnp.bfloat16))

    def pad_w(w, rows, cols):
        wp = jnp.zeros((rows, cols), jnp.bfloat16)
        return wp.at[:w.shape[0], :w.shape[1]].set(w.astype(jnp.bfloat16))

    def pad_b(b, cols):
        bp = jnp.zeros((1, cols), jnp.float32)
        return bp.at[:, :b.shape[1]].set(b.astype(jnp.float32))

    w1 = pad_w(params["w1"], K_PAD, H_PAD); b1 = pad_b(params["b1"], H_PAD)
    w2 = pad_w(params["w2"], H_PAD, H_PAD); b2 = pad_b(params["b2"], H_PAD)
    w3 = pad_w(params["w3"], H_PAD, H_PAD); b3 = pad_b(params["b3"], H_PAD)
    w4 = pad_w(params["w4"], H_PAD, OUT_PAD); b4 = pad_b(params["b4"], OUT_PAD)

    grid = (Bp // tb,)

    def resident(shape):
        # Weights / biases: same block every grid step -> stay VMEM-resident.
        return pl.BlockSpec(shape, lambda i: (0, 0))

    flops = 2 * Bp * (K_PAD * H_PAD + 2 * H_PAD * H_PAD + H_PAD * OUT_PAD)
    bytes_accessed = (
        xp.size * 2
        + (w1.size + w2.size + w3.size + w4.size) * 2
        + (b1.size + b2.size + b3.size + b4.size) * 4
        + Bp * OUT_PAD * 4
    )
    cost = pl.CostEstimate(flops=flops,
                           transcendentals=Bp * OUT_PAD,
                           bytes_accessed=bytes_accessed)

    out = pl.pallas_call(
        mlp_kernel,
        out_shape=jax.ShapeDtypeStruct((Bp, OUT_PAD), jnp.float32),
        grid=grid,
        in_specs=[
            pl.BlockSpec((tb, K_PAD), lambda i: (i, 0)),   # x: tiled over batch
            resident((K_PAD, H_PAD)), resident((1, H_PAD)),
            resident((H_PAD, H_PAD)), resident((1, H_PAD)),
            resident((H_PAD, H_PAD)), resident((1, H_PAD)),
            resident((H_PAD, OUT_PAD)), resident((1, OUT_PAD)),
        ],
        out_specs=pl.BlockSpec((tb, OUT_PAD), lambda i: (i, 0)),
        compiler_params=pltpu.CompilerParams(
            dimension_semantics=("parallel",)),
        cost_estimate=cost,
    )(xp, w1, b1, w2, b2, w3, b3, w4, b4)

    return out[:B, :N_CLASSES]


def init_params(key):
    """Deterministic init mimicking PyTorch nn.Linear default (uniform +-1/sqrt(fan_in))."""
    dims = [(IN_F, 64), (64, 64), (64, 64), (64, N_CLASSES)]
    params = {}
    for i, (fan_in, fan_out) in enumerate(dims, start=1):
        key, kw, kb = jax.random.split(key, 3)
        bound = 1.0 / jnp.sqrt(jnp.float32(fan_in))
        params[f"w{i}"] = jax.random.uniform(
            kw, (fan_in, fan_out), jnp.float32, -bound, bound)
        params[f"b{i}"] = jax.random.uniform(
            kb, (1, fan_out), jnp.float32, -bound, bound)
    return params


def reference_forward(x, params):
    h = x
    for i in range(1, 4):
        h = jnp.maximum(h @ params[f"w{i}"] + params[f"b{i}"], 0.0)
    logits = h @ params["w4"] + params["b4"]
    return jax.nn.log_softmax(logits, axis=1)


if __name__ == "__main__":
    key = jax.random.PRNGKey(0)
    kx, kp = jax.random.split(key)

    batch = 20                       # deliberately NOT a multiple of the tile
    x = jax.random.normal(kx, (batch, IN_F), jnp.float32)
    params = init_params(kp)

    # Small tile (8) so the test exercises a multi-step grid + ragged tail.
    out = neural_net_forward(x, params, tile_b=8)
    jax.block_until_ready(out)

    ref = reference_forward(x, params)
    assert out.shape == (batch, N_CLASSES)
    err = float(jnp.max(jnp.abs(out - ref)))
    assert err < 5e-2, f"mismatch vs JAX reference, max abs err {err}"
    # log-softmax rows should (approximately) normalize
    assert jnp.allclose(jnp.sum(jnp.exp(out), axis=1), 1.0, atol=1e-3)

    print("KERNEL_OK")
</pallas_src>

<mosaic_0001>
module attributes {stable_mosaic.version = 11 : i64} {
  func.func @mlp_kernel(%arg0: i32, %arg1: memref<8x896xbf16, #tpu.memory_space<vmem>>, %arg2: memref<896x128xbf16, #tpu.memory_space<vmem>>, %arg3: memref<1x128xf32, #tpu.memory_space<vmem>>, %arg4: memref<128x128xbf16, #tpu.memory_space<vmem>>, %arg5: memref<1x128xf32, #tpu.memory_space<vmem>>, %arg6: memref<128x128xbf16, #tpu.memory_space<vmem>>, %arg7: memref<1x128xf32, #tpu.memory_space<vmem>>, %arg8: memref<128x128xbf16, #tpu.memory_space<vmem>>, %arg9: memref<1x128xf32, #tpu.memory_space<vmem>>, %arg10: memref<8x128xf32, #tpu.memory_space<vmem>>) attributes {dimension_semantics = [#tpu.dimension_semantics<parallel>], iteration_bounds = array<i64: 3>, scalar_prefetch = 0 : i64, scratch_operands = 0 : i64, tpu.core_type = #tpu.core_type<tc>, window_params = [{transform_indices = @transform_0, window_bounds = array<i64: 8, 896>}, {pipeline_mode = #tpu.pipeline_mode<synchronous>, transform_indices = @transform_1, window_bounds = array<i64: 896, 128>}, {pipeline_mode = #tpu.pipeline_mode<synchronous>, transform_indices = @transform_2, window_bounds = array<i64: 1, 128>}, {pipeline_mode = #tpu.pipeline_mode<synchronous>, transform_indices = @transform_3, window_bounds = array<i64: 128, 128>}, {pipeline_mode = #tpu.pipeline_mode<synchronous>, transform_indices = @transform_4, window_bounds = array<i64: 1, 128>}, {pipeline_mode = #tpu.pipeline_mode<synchronous>, transform_indices = @transform_5, window_bounds = array<i64: 128, 128>}, {pipeline_mode = #tpu.pipeline_mode<synchronous>, transform_indices = @transform_6, window_bounds = array<i64: 1, 128>}, {pipeline_mode = #tpu.pipeline_mode<synchronous>, transform_indices = @transform_7, window_bounds = array<i64: 128, 128>}, {pipeline_mode = #tpu.pipeline_mode<synchronous>, transform_indices = @transform_8, window_bounds = array<i64: 1, 128>}, {transform_indices = @transform_9, window_bounds = array<i64: 8, 128>}]} {
    %c0 = arith.constant 0 : index
    %c0_0 = arith.constant 0 : index
    %0 = vector.load %arg1[%c0, %c0_0] : memref<8x896xbf16, #tpu.memory_space<vmem>>, vector<8x896xbf16>
    %c0_1 = arith.constant 0 : index
    %c0_2 = arith.constant 0 : index
    %1 = vector.load %arg2[%c0_1, %c0_2] : memref<896x128xbf16, #tpu.memory_space<vmem>>, vector<896x128xbf16>
    %cst = arith.constant dense<0.000000e+00> : vector<8x128xf32>
    %2 = tpu.matmul %0, %1, %cst {dimension_numbers = #tpu.dot_dimension_numbers<[1], [0], [0], [1], [0, 0, 1, 1], [], []>} : vector<8x896xbf16>, vector<896x128xbf16>, vector<8x128xf32> -> vector<8x128xf32>
    %c0_3 = arith.constant 0 : index
    %c0_4 = arith.constant 0 : index
    %3 = vector.load %arg3[%c0_3, %c0_4] : memref<1x128xf32, #tpu.memory_space<vmem>>, vector<1x128xf32>
    %4 = vector.broadcast %3 : vector<1x128xf32> to vector<8x128xf32>
    %5 = arith.addf %2, %4 : vector<8x128xf32>
    %cst_5 = arith.constant 0.000000e+00 : f32
    %6 = vector.broadcast %cst_5 : f32 to vector<8x128xf32>
    %7 = arith.maximumf %5, %6 : vector<8x128xf32>
    %8 = arith.truncf %7 : vector<8x128xf32> to vector<8x128xbf16>
    %c0_6 = arith.constant 0 : index
    %c0_7 = arith.constant 0 : index
    %9 = vector.load %arg4[%c0_6, %c0_7] : memref<128x128xbf16, #tpu.memory_space<vmem>>, vector<128x128xbf16>
    %cst_8 = arith.constant dense<0.000000e+00> : vector<8x128xf32>
    %10 = tpu.matmul %8, %9, %cst_8 {dimension_numbers = #tpu.dot_dimension_numbers<[1], [0], [0], [1], [0, 0, 1, 1], [], []>} : vector<8x128xbf16>, vector<128x128xbf16>, vector<8x128xf32> -> vector<8x128xf32>
    %c0_9 = arith.constant 0 : index
    %c0_10 = arith.constant 0 : index
    %11 = vector.load %arg5[%c0_9, %c0_10] : memref<1x128xf32, #tpu.memory_space<vmem>>, vector<1x128xf32>
    %12 = vector.broadcast %11 : vector<1x128xf32> to vector<8x128xf32>
    %13 = arith.addf %10, %12 : vector<8x128xf32>
    %cst_11 = arith.constant 0.000000e+00 : f32
    %14 = vector.broadcast %cst_11 : f32 to vector<8x128xf32>
    %15 = arith.maximumf %13, %14 : vector<8x128xf32>
    %16 = arith.truncf %15 : vector<8x128xf32> to vector<8x128xbf16>
    %c0_12 = arith.constant 0 : index
    %c0_13 = arith.constant 0 : index
    %17 = vector.load %arg6[%c0_12, %c0_13] : memref<128x128xbf16, #tpu.memory_space<vmem>>, vector<128x128xbf16>
    %cst_14 = arith.constant dense<0.000000e+00> : vector<8x128xf32>
    %18 = tpu.matmul %16, %17, %cst_14 {dimension_numbers = #tpu.dot_dimension_numbers<[1], [0], [0], [1], [0, 0, 1, 1], [], []>} : vector<8x128xbf16>, vector<128x128xbf16>, vector<8x128xf32> -> vector<8x128xf32>
    %c0_15 = arith.constant 0 : index
    %c0_16 = arith.constant 0 : index
    %19 = vector.load %arg7[%c0_15, %c0_16] : memref<1x128xf32, #tpu.memory_space<vmem>>, vector<1x128xf32>
    %20 = vector.broadcast %19 : vector<1x128xf32> to vector<8x128xf32>
    %21 = arith.addf %18, %20 : vector<8x128xf32>
    %cst_17 = arith.constant 0.000000e+00 : f32
    %22 = vector.broadcast %cst_17 : f32 to vector<8x128xf32>
    %23 = arith.maximumf %21, %22 : vector<8x128xf32>
    %24 = arith.truncf %23 : vector<8x128xf32> to vector<8x128xbf16>
    %c0_18 = arith.constant 0 : index
    %c0_19 = arith.constant 0 : index
    %25 = vector.load %arg8[%c0_18, %c0_19] : memref<128x128xbf16, #tpu.memory_space<vmem>>, vector<128x128xbf16>
    %cst_20 = arith.constant dense<0.000000e+00> : vector<8x128xf32>
    %26 = tpu.matmul %24, %25, %cst_20 {dimension_numbers = #tpu.dot_dimension_numbers<[1], [0], [0], [1], [0, 0, 1, 1], [], []>} : vector<8x128xbf16>, vector<128x128xbf16>, vector<8x128xf32> -> vector<8x128xf32>
    %c0_21 = arith.constant 0 : index
    %c0_22 = arith.constant 0 : index
    %27 = vector.load %arg9[%c0_21, %c0_22] : memref<1x128xf32, #tpu.memory_space<vmem>>, vector<1x128xf32>
    %28 = vector.broadcast %27 : vector<1x128xf32> to vector<8x128xf32>
    %29 = arith.addf %26, %28 : vector<8x128xf32>
    %30 = tpu.iota {dimensions = array<i32: 1>} : vector<8x128xi32>
    %c10_i32 = arith.constant 10 : i32
    %31 = vector.broadcast %c10_i32 : i32 to vector<8x128xi32>
    %32 = arith.cmpi slt, %30, %31 : vector<8x128xi32>
    %cst_23 = arith.constant -1.000000e+30 : f32
    %33 = vector.broadcast %cst_23 : f32 to vector<8x128xf32>
    %34 = arith.select %32, %29, %33 : vector<8x128xi1>, vector<8x128xf32>
    %cst_24 = arith.constant dense<0xFF800000> : vector<8xf32>
    %35 = vector.multi_reduction <maximumf>, %34, %cst_24 [1] : vector<8x128xf32> to vector<8xf32>
    %36 = vector.shape_cast %35 : vector<8xf32> to vector<8x1xf32>
    %37 = vector.broadcast %36 : vector<8x1xf32> to vector<8x128xf32>
    %38 = arith.subf %29, %37 : vector<8x128xf32>
    %39 = math.exp %38 : vector<8x128xf32>
    %cst_25 = arith.constant 0.000000e+00 : f32
    %40 = vector.broadcast %cst_25 : f32 to vector<8x128xf32>
    %41 = arith.select %32, %39, %40 : vector<8x128xi1>, vector<8x128xf32>
    %cst_26 = arith.constant dense<0.000000e+00> : vector<8xf32>
    %42 = vector.multi_reduction <add>, %41, %cst_26 [1] : vector<8x128xf32> to vector<8xf32>
    %43 = vector.shape_cast %42 : vector<8xf32> to vector<8x1xf32>
    %44 = math.log %43 : vector<8x1xf32>
    %45 = vector.broadcast %36 : vector<8x1xf32> to vector<8x128xf32>
    %46 = arith.subf %29, %45 : vector<8x128xf32>
    %47 = vector.broadcast %44 : vector<8x1xf32> to vector<8x128xf32>
    %48 = arith.subf %46, %47 : vector<8x128xf32>
    %cst_27 = arith.constant 0.000000e+00 : f32
    %49 = vector.broadcast %cst_27 : f32 to vector<8x128xf32>
    %50 = arith.select %32, %48, %49 : vector<8x128xi1>, vector<8x128xf32>
    %c0_28 = arith.constant 0 : index
    %c0_29 = arith.constant 0 : index
    %51 = vector.load %arg10[%c0_28, %c0_29] : memref<8x128xf32, #tpu.memory_space<vmem>>, vector<8x128xf32>
    tpu.vector_store %arg10[%c0_28, %c0_29], %50 {strides = array<i32>} : memref<8x128xf32, #tpu.memory_space<vmem>>, vector<8x128xf32>,
    return
  }
  func.func @transform_0(%arg0: i32) -> (i32, i32) {
    %c0_i32 = arith.constant 0 : i32
    %c0_i32_0 = arith.constant 0 : i32
    return %arg0, %c0_i32 : i32, i32
  }
  func.func @transform_1(%arg0: i32) -> (i32, i32) {
    %c0_i32 = arith.constant 0 : i32
    %c0_i32_0 = arith.constant 0 : i32
    %c0_i32_1 = arith.constant 0 : i32
    return %c0_i32, %c0_i32_0 : i32, i32
  }
  func.func @transform_2(%arg0: i32) -> (i32, i32) {
    %c0_i32 = arith.constant 0 : i32
    %c0_i32_0 = arith.constant 0 : i32
    %c0_i32_1 = arith.constant 0 : i32
    return %c0_i32, %c0_i32_0 : i32, i32
  }
  func.func @transform_3(%arg0: i32) -> (i32, i32) {
    %c0_i32 = arith.constant 0 : i32
    %c0_i32_0 = arith.constant 0 : i32
    %c0_i32_1 = arith.constant 0 : i32
    return %c0_i32, %c0_i32_0 : i32, i32
  }
  func.func @transform_4(%arg0: i32) -> (i32, i32) {
    %c0_i32 = arith.constant 0 : i32
    %c0_i32_0 = arith.constant 0 : i32
    %c0_i32_1 = arith.constant 0 : i32
    return %c0_i32, %c0_i32_0 : i32, i32
  }
  func.func @transform_5(%arg0: i32) -> (i32, i32) {
    %c0_i32 = arith.constant 0 : i32
    %c0_i32_0 = arith.constant 0 : i32
    %c0_i32_1 = arith.constant 0 : i32
    return %c0_i32, %c0_i32_0 : i32, i32
  }
  func.func @transform_6(%arg0: i32) -> (i32, i32) {
    %c0_i32 = arith.constant 0 : i32
    %c0_i32_0 = arith.constant 0 : i32
    %c0_i32_1 = arith.constant 0 : i32
    return %c0_i32, %c0_i32_0 : i32, i32
  }
  func.func @transform_7(%arg0: i32) -> (i32, i32) {
    %c0_i32 = arith.constant 0 : i32
    %c0_i32_0 = arith.constant 0 : i32
    %c0_i32_1 = arith.constant 0 : i32
    return %c0_i32, %c0_i32_0 : i32, i32
  }
  func.func @transform_8(%arg0: i32) -> (i32, i32) {
    %c0_i32 = arith.constant 0 : i32
    %c0_i32_0 = arith.constant 0 : i32
    %c0_i32_1 = arith.constant 0 : i32
    return %c0_i32, %c0_i32_0 : i32, i32
  }
  func.func @transform_9(%arg0: i32) -> (i32, i32) {
    %c0_i32 = arith.constant 0 : i32
    %c0_i32_0 = arith.constant 0 : i32
    return %arg0, %c0_i32 : i32, i32
  }
}

</mosaic_0001>

<llo_original>
// kernel: neural_net_forward.1
$region0: #{neural_net_forward.1}
  #allocation0 [shape = 'u32[]', space=smem, size = 0x4, offset = 0x4, fixed_abs, tag = 'smem constant byte address 0x4 - core index']
  #allocation1 [shape = 'u32[144,128]{1,0:T(1,128)}', space=vmem, size = 0x12000, scoped, tag = 'internal scratch']
  %s0 = inlined_call_operand.vmem [shape: bf16[24,896], index: 0, kind: input, shape index: {}]
  %s1 = inlined_call_operand.vmem [shape: bf16[896,128], index: 1, kind: input, shape index: {}]
  %s2 = inlined_call_operand.vmem [shape: f32[1,128], index: 2, kind: input, shape index: {}]
  %s3 = inlined_call_operand.vmem [shape: bf16[128,128], index: 3, kind: input, shape index: {}]
  %s4 = inlined_call_operand.vmem [shape: f32[1,128], index: 4, kind: input, shape index: {}]
  %s5 = inlined_call_operand.vmem [shape: bf16[128,128], index: 5, kind: input, shape index: {}]
  %s6 = inlined_call_operand.vmem [shape: f32[1,128], index: 6, kind: input, shape index: {}]
  %s7 = inlined_call_operand.vmem [shape: bf16[128,128], index: 7, kind: input, shape index: {}]
  %s8 = inlined_call_operand.vmem [shape: f32[1,128], index: 8, kind: input, shape index: {}]
  %s9 = inlined_call_operand.vmem [shape: f32[24,128], index: 9, kind: output, shape index: {}]
  %s10 = sld [smem:[#allocation0]]
  $region69: #{neural_net_forward.1} parent=0
    _
  %s12 = ssub.s32 1, %s10
  %s13 = scalar_select 0, %s12, %s10
  loop: start=0, step=1, limit=5
  $region2: #{neural_net_forward.1} parent=0 // loop_pre_header
    _
  $region3: #{neural_net_forward.1} parent=0 // loop_header
    %s15 = sphi 0, %s19
    %p16 = scmp.ge.s32.totalorder %s15, 5
    %s25 = sphi 0, %s27
    %s28 = sphi 0, %s25
    %s29 = sphi 0, %s28
    %s45 = sphi 0, %s29
    %s49 = sphi 0, %s49
    %s51 = sphi 0, %s49
    %s52 = sphi 0, %s51
    %s66 = sphi 0, %s52
    %s70 = sphi 0, %s70
    %s72 = sphi 0, %s70
    %s73 = sphi 0, %s72
    %s87 = sphi 0, %s73
    %s91 = sphi 0, %s91
    %s93 = sphi 0, %s91
    %s94 = sphi 0, %s93
    %s108 = sphi 0, %s94
    %s112 = sphi 0, %s112
    %s114 = sphi 0, %s112
    %s115 = sphi 0, %s114
    %s129 = sphi 0, %s115
    %s133 = sphi 0, %s133
    %s135 = sphi 0, %s133
    %s136 = sphi 0, %s135
    %s150 = sphi 0, %s136
    %s154 = sphi 0, %s154
    %s156 = sphi 0, %s154
    %s157 = sphi 0, %s156
    %s171 = sphi 0, %s157
    %s175 = sphi 0, %s175
    %s177 = sphi 0, %s175
    %s178 = sphi 0, %s177
    %s192 = sphi 0, %s178
    %s196 = sphi 0, %s196
    %s198 = sphi 0, %s196
    %s199 = sphi 0, %s198
    %s213 = sphi 0, %s199
    %s219 = sphi 0, %s221
    %s222 = sphi 0, %s219
    %s223 = sphi 0, %s222
    %s239 = sphi 0, %s223
  $region4: #{neural_net_forward.1} parent=0 // loop_header_branch
    %18 = sbr.rel (%p16) target = $region8
  $region5: #{neural_net_forward.1} parent=0 // loop_body
    %s20 = ssub.s32 %s15, 1
    %s21 = ssub.s32 %s15, 2
    %s22 = sadd.s32 %s15, 1
    %s23 = ssub.s32 %s15, %s22
    %p24 = scmp.eq.s32.totalorder %s23, 0
    %s26 = sadd.s32 %s25, 1
    %s27 = scalar_select %p24, %s25, %s26
    %p30 = pneg %p24
    %p31 = scmp.eq.s32.totalorder %s15, 2
    %p32 = por %p30, %p31
    %p33 = scmp.ne.s32.totalorder %s25, %s28
    %p34 = scmp.eq.s32.totalorder %s15, 0
    %p35 = por %p33, %p34
    %p36 = scmp.ne.s32.totalorder %s25, %s28
    %p37 = scmp.eq.s32.totalorder %s20, 2
    %p38 = por %p36, %p37
    %p39 = scmp.ne.s32.totalorder %s28, %s29
    %p40 = scmp.eq.s32.totalorder %s20, 0
    %p41 = por %p39, %p40
    %p42 = scmp.ne.s32.totalorder %s28, %s29
    %p43 = scmp.eq.s32.totalorder %s21, 2
    %p44 = por %p42, %p43
    %p46 = scmp.ne.s32.totalorder %s29, %s45
    %p47 = scmp.eq.s32.totalorder %s21, 0
    %p48 = por %p46, %p47
    %s50 = sadd.s32 %s49, 1
    %p53 = scmp.eq.s32.totalorder %s15, 2
    %p54 = scmp.ne.s32.totalorder %s49, %s51
    %p55 = scmp.eq.s32.totalorder %s15, 0
    %p56 = por %p54, %p55
    %p57 = scmp.ne.s32.totalorder %s49, %s51
    %p58 = scmp.eq.s32.totalorder %s20, 2
    %p59 = por %p57, %p58
    %p60 = scmp.ne.s32.totalorder %s51, %s52
    %p61 = scmp.eq.s32.totalorder %s20, 0
    %p62 = por %p60, %p61
    %p63 = scmp.ne.s32.totalorder %s51, %s52
    %p64 = scmp.eq.s32.totalorder %s21, 2
    %p65 = por %p63, %p64
    %p67 = scmp.ne.s32.totalorder %s52, %s66
    %p68 = scmp.eq.s32.totalorder %s21, 0
    %p69 = por %p67, %p68
    %s71 = sadd.s32 %s70, 1
    %p74 = scmp.eq.s32.totalorder %s15, 2
    %p75 = scmp.ne.s32.totalorder %s70, %s72
    %p76 = scmp.eq.s32.totalorder %s15, 0
    %p77 = por %p75, %p76
    %p78 = scmp.ne.s32.totalorder %s70, %s72
    %p79 = scmp.eq.s32.totalorder %s20, 2
    %p80 = por %p78, %p79
    %p81 = scmp.ne.s32.totalorder %s72, %s73
    %p82 = scmp.eq.s32.totalorder %s20, 0
    %p83 = por %p81, %p82
    %p84 = scmp.ne.s32.totalorder %s72, %s73
    %p85 = scmp.eq.s32.totalorder %s21, 2
    %p86 = por %p84, %p85
    %p88 = scmp.ne.s32.totalorder %s73, %s87
    %p89 = scmp.eq.s32.totalorder %s21, 0
    %p90 = por %p88, %p89
    %s92 = sadd.s32 %s91, 1
    %p95 = scmp.eq.s32.totalorder %s15, 2
    %p96 = scmp.ne.s32.totalorder %s91, %s93
    %p97 = scmp.eq.s32.totalorder %s15, 0
    %p98 = por %p96, %p97
    %p99 = scmp.ne.s32.totalorder %s91, %s93
    %p100 = scmp.eq.s32.totalorder %s20, 2
    %p101 = por %p99, %p100
    %p102 = scmp.ne.s32.totalorder %s93, %s94
    %p103 = scmp.eq.s32.totalorder %s20, 0
    %p104 = por %p102, %p103
    %p105 = scmp.ne.s32.totalorder %s93, %s94
    %p106 = scmp.eq.s32.totalorder %s21, 2
    %p107 = por %p105, %p106
    %p109 = scmp.ne.s32.totalorder %s94, %s108
    %p110 = scmp.eq.s32.totalorder %s21, 0
    %p111 = por %p109, %p110
    %s113 = sadd.s32 %s112, 1
    %p116 = scmp.eq.s32.totalorder %s15, 2
    %p117 = scmp.ne.s32.totalorder %s112, %s114
    %p118 = scmp.eq.s32.totalorder %s15, 0
    %p119 = por %p117, %p118
    %p120 = scmp.ne.s32.totalorder %s112, %s114
    %p121 = scmp.eq.s32.totalorder %s20, 2
    %p122 = por %p120, %p121
    %p123 = scmp.ne.s32.totalorder %s114, %s115
    %p124 = scmp.eq.s32.totalorder %s20, 0
    %p125 = por %p123, %p124
    %p126 = scmp.ne.s32.totalorder %s114, %s115
    %p127 = scmp.eq.s32.totalorder %s21, 2
    %p128 = por %p126, %p127
    %p130 = scmp.ne.s32.totalorder %s115, %s129
    %p131 = scmp.eq.s32.totalorder %s21, 0
    %p132 = por %p130, %p131
    %s134 = sadd.s32 %s133, 1
    %p137 = scmp.eq.s32.totalorder %s15, 2
    %p138 = scmp.ne.s32.totalorder %s133, %s135
    %p139 = scmp.eq.s32.totalorder %s15, 0
    %p140 = por %p138, %p139
    %p141 = scmp.ne.s32.totalorder %s133, %s135
    %p142 = scmp.eq.s32.totalorder %s20, 2
    %p143 = por %p141, %p142
    %p144 = scmp.ne.s32.totalorder %s135, %s136
    %p145 = scmp.eq.s32.totalorder %s20, 0
    %p146 = por %p144, %p145
    %p147 = scmp.ne.s32.totalorder %s135, %s136
    %p148 = scmp.eq.s32.totalorder %s21, 2
    %p149 = por %p147, %p148
    %p151 = scmp.ne.s32.totalorder %s136, %s150
    %p152 = scmp.eq.s32.totalorder %s21, 0
    %p153 = por %p151, %p152
    %s155 = sadd.s32 %s154, 1
    %p158 = scmp.eq.s32.totalorder %s15, 2
    %p159 = scmp.ne.s32.totalorder %s154, %s156
    %p160 = scmp.eq.s32.totalorder %s15, 0
    %p161 = por %p159, %p160
    %p162 = scmp.ne.s32.totalorder %s154, %s156
    %p163 = scmp.eq.s32.totalorder %s20, 2
    %p164 = por %p162, %p163
    %p165 = scmp.ne.s32.totalorder %s156, %s157
    %p166 = scmp.eq.s32.totalorder %s20, 0
    %p167 = por %p165, %p166
    %p168 = scmp.ne.s32.totalorder %s156, %s157
    %p169 = scmp.eq.s32.totalorder %s21, 2
    %p170 = por %p168, %p169
    %p172 = scmp.ne.s32.totalorder %s157, %s171
    %p173 = scmp.eq.s32.totalorder %s21, 0
    %p174 = por %p172, %p173
    %s176 = sadd.s32 %s175, 1
    %p179 = scmp.eq.s32.totalorder %s15, 2
    %p180 = scmp.ne.s32.totalorder %s175, %s177
    %p181 = scmp.eq.s32.totalorder %s15, 0
    %p182 = por %p180, %p181
    %p183 = scmp.ne.s32.totalorder %s175, %s177
    %p184 = scmp.eq.s32.totalorder %s20, 2
    %p185 = por %p183, %p184
    %p186 = scmp.ne.s32.totalorder %s177, %s178
    %p187 = scmp.eq.s32.totalorder %s20, 0
    %p188 = por %p186, %p187
    %p189 = scmp.ne.s32.totalorder %s177, %s178
    %p190 = scmp.eq.s32.totalorder %s21, 2
    %p191 = por %p189, %p190
    %p193 = scmp.ne.s32.totalorder %s178, %s192
    %p194 = scmp.eq.s32.totalorder %s21, 0
    %p195 = por %p193, %p194
    %s197 = sadd.s32 %s196, 1
    %p200 = scmp.eq.s32.totalorder %s15, 2
    %p201 = scmp.ne.s32.totalorder %s196, %s198
    %p202 = scmp.eq.s32.totalorder %s15, 0
    %p203 = por %p201, %p202
    %p204 = scmp.ne.s32.totalorder %s196, %s198
    %p205 = scmp.eq.s32.totalorder %s20, 2
    %p206 = por %p204, %p205
    %p207 = scmp.ne.s32.totalorder %s198, %s199
    %p208 = scmp.eq.s32.totalorder %s20, 0
    %p209 = por %p207, %p208
    %p210 = scmp.ne.s32.totalorder %s198, %s199
    %p211 = scmp.eq.s32.totalorder %s21, 2
    %p212 = por %p210, %p211
    %p214 = scmp.ne.s32.totalorder %s199, %s213
    %p215 = scmp.eq.s32.totalorder %s21, 0
    %p216 = por %p214, %p215
    %s217 = ssub.s32 %s15, %s22
    %p218 = scmp.eq.s32.totalorder %s217, 0
    %s220 = sadd.s32 %s219, 1
    %s221 = scalar_select %p218, %s219, %s220
    %p224 = pneg %p218
    %p225 = scmp.eq.s32.totalorder %s15, 2
    %p226 = por %p224, %p225
    %p227 = scmp.ne.s32.totalorder %s219, %s222
    %p228 = scmp.eq.s32.totalorder %s15, 0
    %p229 = por %p227, %p228
    %p230 = scmp.ne.s32.totalorder %s219, %s222
    %p231 = scmp.eq.s32.totalorder %s20, 2
    %p232 = por %p230, %p231
    %p233 = scmp.ne.s32.totalorder %s222, %s223
    %p234 = scmp.eq.s32.totalorder %s20, 0
    %p235 = por %p233, %p234
    %p236 = scmp.ne.s32.totalorder %s222, %s223
    %p237 = scmp.eq.s32.totalorder %s21, 2
    %p238 = por %p236, %p237
    %p240 = scmp.ne.s32.totalorder %s223, %s239
    %p241 = scmp.eq.s32.totalorder %s21, 0
    %p242 = por %p240, %p241
    %p243 = scmp.le.s32.totalorder 1, %s15
    %p244 = scmp.lt.s32.totalorder %s15, 4
    %p245 = pnand %p243, %p244
    %p246 = pneg %p245
    // Predicated region
    $region9: #{neural_net_forward.1} parent=5 // pred_check
      _
    $region10: #{neural_net_forward.1} parent=5 // pred_check_branch
      %248 = sbr.rel (%p245) target = $region12
    $region11: #{neural_net_forward.1} parent=5 // pred_region
      %s249 = ssub.s32 %s15, 1
      // Predicated region
      $region13: #{neural_net_forward.1} parent=11 // pred_check
        %p250 = pneg %p62
      $region14: #{neural_net_forward.1} parent=11 // pred_check_branch
        %252 = sbr.rel (%p250) target = $region16
      $region15: #{neural_net_forward.1} parent=11 // pred_region
        _
      $region16: #{neural_net_forward.1} parent=11 // pred_fallthru
        _
      // Predicated region
      $region17: #{neural_net_forward.1} parent=11 // pred_check
        %p253 = pneg %p83
      $region18: #{neural_net_forward.1} parent=11 // pred_check_branch
        %255 = sbr.rel (%p253) target = $region20
      $region19: #{neural_net_forward.1} parent=11 // pred_region
        _
      $region20: #{neural_net_forward.1} parent=11 // pred_fallthru
        _
      // Predicated region
      $region21: #{neural_net_forward.1} parent=11 // pred_check
        %p256 = pneg %p104
      $region22: #{neural_net_forward.1} parent=11 // pred_check_branch
        %258 = sbr.rel (%p256) target = $region24
      $region23: #{neural_net_forward.1} parent=11 // pred_region
        _
      $region24: #{neural_net_forward.1} parent=11 // pred_fallthru
        _
      // Predicated region
      $region25: #{neural_net_forward.1} parent=11 // pred_check
        %p259 = pneg %p125
      $region26: #{neural_net_forward.1} parent=11 // pred_check_branch
        %261 = sbr.rel (%p259) target = $region28
      $region27: #{neural_net_forward.1} parent=11 // pred_region
        _
      $region28: #{neural_net_forward.1} parent=11 // pred_fallthru
        _
      // Predicated region
      $region29: #{neural_net_forward.1} parent=11 // pred_check
        %p262 = pneg %p146
      $region30: #{neural_net_forward.1} parent=11 // pred_check_branch
        %264 = sbr.rel (%p262) target = $region32
      $region31: #{neural_net_forward.1} parent=11 // pred_region
        _
      $region32: #{neural_net_forward.1} parent=11 // pred_fallthru
        _
      // Predicated region
      $region33: #{neural_net_forward.1} parent=11 // pred_check
        %p265 = pneg %p167
      $region34: #{neural_net_forward.1} parent=11 // pred_check_branch
        %267 = sbr.rel (%p265) target = $region36
      $region35: #{neural_net_forward.1} parent=11 // pred_region
        _
      $region36: #{neural_net_forward.1} parent=11 // pred_fallthru
        _
      // Predicated region
      $region37: #{neural_net_forward.1} parent=11 // pred_check
        %p268 = pneg %p188
      $region38: #{neural_net_forward.1} parent=11 // pred_check_branch
        %270 = sbr.rel (%p268) target = $region40
      $region39: #{neural_net_forward.1} parent=11 // pred_region
        _
      $region40: #{neural_net_forward.1} parent=11 // pred_fallthru
        _
      // Predicated region
      $region41: #{neural_net_forward.1} parent=11 // pred_check
        %p271 = pneg %p209
      $region42: #{neural_net_forward.1} parent=11 // pred_check_branch
        %273 = sbr.rel (%p271) target = $region44
      $region43: #{neural_net_forward.1} parent=11 // pred_region
        _
      $region44: #{neural_net_forward.1} parent=11 // pred_fallthru
        _
    $region12: #{neural_net_forward.1} parent=5 // pred_fallthru
      _
    %p274 = scmp.lt.s32.totalorder %s15, 3
    // Predicated region
    $region45: #{neural_net_forward.1} parent=5 // pred_check
      %p275 = pneg %p274
    $region46: #{neural_net_forward.1} parent=5 // pred_check_branch
      %277 = sbr.rel (%p275) target = $region48
    $region47: #{neural_net_forward.1} parent=5 // pred_region
      // Predicated region
      $region49: #{neural_net_forward.1} parent=47 // pred_check
        %p278 = pneg %p35
      $region50: #{neural_net_forward.1} parent=47 // pred_check_branch
        %280 = sbr.rel (%p278) target = $region52
      $region51: #{neural_net_forward.1} parent=47 // pred_region
        %p281 = scmp.lt.s32.totalorder %s15, 2
        %s282 = scalar_select %p281, %s15, 2
        %s283 = smul.addr %s282, 7
        %s284 = smul.addr %s283, 4
        %s285 = scalar_lea.vmem %s0, %s284
      $region52: #{neural_net_forward.1} parent=47 // pred_fallthru
        _
    $region48: #{neural_net_forward.1} parent=5 // pred_fallthru
      _
    %p286 = scmp.le.s32.totalorder 1, %s15
    %p287 = scmp.lt.s32.totalorder %s15, 4
    %p288 = pnand %p286, %p287
    %p289 = pneg %p288
    // Predicated region
    $region53: #{neural_net_forward.1} parent=5 // pred_check
      _
    $region54: #{neural_net_forward.1} parent=5 // pred_check_branch
      %291 = sbr.rel (%p288) target = $region56
    $region55: #{neural_net_forward.1} parent=5 // pred_region
      %s292 = ssub.s32 %s15, 1
      %p293 = scmp.lt.s32.totalorder %s20, 2
      %s294 = scalar_select %p293, %s20, 2
      %s295 = smul.addr %s294, 7
      %s296 = smul.addr %s295, 4
      %s297 = scalar_lea.vmem %s0, %s296
      %p298 = pneg %p41
      %p299 = pneg %p38
      %p300 = pneg %p62
      %p301 = pneg %p59
      %p302 = pneg %p83
      %p303 = pneg %p80
      %p304 = pneg %p104
      %p305 = pneg %p101
      %p306 = pneg %p125
      %p307 = pneg %p122
      %p308 = pneg %p146
      %p309 = pneg %p143
      %p310 = pneg %p167
      %p311 = pneg %p164
      %p312 = pneg %p188
      %p313 = pneg %p185
      %p314 = pneg %p209
      %p315 = pneg %p206
      %p316 = pneg %p235
      %p317 = pneg %p232
      %p318 = scmp.lt.s32.totalorder %s20, 2
      %s319 = scalar_select %p318, %s20, 2
      %s320 = smul.addr %s319, 8
      %s321 = scalar_lea.vmem %s9, %s320
      %p322 = scmp.lt.s32.totalorder %s20, 2
      %s323 = scalar_select %p322, %s20, 2
      %s324 = smul.addr %s323, 7
      %s325 = smul.addr %s324, 4
      %s326 = scalar_lea.vmem %s0, %s325
      %p327 = scmp.lt.s32.totalorder %s20, 2
      %s328 = scalar_select %p327, %s20, 2
      %s329 = smul.addr %s328, 8
      %s330 = scalar_lea.vmem %s9, %s329
      %v332 = vld [vmem:[%s326] sm:$0xff]
      %v333 = vld [vmem:[%s326 + $0x8] sm:$0xff]
      %v334 = vld [vmem:[%s326 + $0x10] sm:$0xff]
      %v335 = vld [vmem:[%s326 + $0x18] sm:$0xf]
      %v336 = vld [vmem:[%s1] sm:$0xf]
      %v337 = vld [vmem:[%s1 + $0x4] sm:$0xf]
      %v338 = vld [vmem:[%s1 + $0x8] sm:$0xf]
      %v339 = vld [vmem:[%s1 + $0xc] sm:$0xf]
      %v340 = vld [vmem:[%s1 + $0x10] sm:$0xf]
      %v341 = vld [vmem:[%s1 + $0x14] sm:$0xf]
      %v342 = vld [vmem:[%s1 + $0x18] sm:$0xf]
      %v343 = vld [vmem:[%s1 + $0x1c] sm:$0xf]
      %v344 = vld [vmem:[%s1 + $0x20] sm:$0xf]
      %v345 = vld [vmem:[%s1 + $0x24] sm:$0xf]
      %v346 = vld [vmem:[%s1 + $0x28] sm:$0xf]
      %v347 = vld [vmem:[%s1 + $0x2c] sm:$0xf]
      %v348 = vld [vmem:[%s1 + $0x30] sm:$0xf]
      %v349 = vld [vmem:[%s1 + $0x34] sm:$0xf]
      %v350 = vld [vmem:[%s1 + $0x38] sm:$0xf]
      %v351 = vld [vmem:[%s1 + $0x3c] sm:$0xf]
      %v352 = vld [vmem:[%s1 + $0x40] sm:$0xf]
      %v353 = vld [vmem:[%s1 + $0x44] sm:$0xf]
      %v354 = vld [vmem:[%s1 + $0x48] sm:$0xf]
      %v355 = vld [vmem:[%s1 + $0x4c] sm:$0xf]
      %v356 = vld [vmem:[%s1 + $0x50] sm:$0xf]
      %v357 = vld [vmem:[%s1 + $0x54] sm:$0xf]
      %v358 = vld [vmem:[%s1 + $0x58] sm:$0xf]
      %v359 = vld [vmem:[%s1 + $0x5c] sm:$0xf]
      %v360 = vld [vmem:[%s1 + $0x60] sm:$0xf]
      %v361 = vld [vmem:[%s1 + $0x64] sm:$0xf]
      %v362 = vld [vmem:[%s1 + $0x68] sm:$0xf]
      %v363 = vld [vmem:[%s1 + $0x6c] sm:$0xf]
      %v364 = vld [vmem:[%s1 + $0x70] sm:$0xf]
      %v365 = vld [vmem:[%s1 + $0x74] sm:$0xf]
      %v366 = vld [vmem:[%s1 + $0x78] sm:$0xf]
      %v367 = vld [vmem:[%s1 + $0x7c] sm:$0xf]
      %v368 = vld [vmem:[%s1 + $0x80] sm:$0xf]
      %v369 = vld [vmem:[%s1 + $0x84] sm:$0xf]
      %v370 = vld [vmem:[%s1 + $0x88] sm:$0xf]
      %v371 = vld [vmem:[%s1 + $0x8c] sm:$0xf]
      %v372 = vld [vmem:[%s1 + $0x90] sm:$0xf]
      %v373 = vld [vmem:[%s1 + $0x94] sm:$0xf]
      %v374 = vld [vmem:[%s1 + $0x98] sm:$0xf]
      %v375 = vld [vmem:[%s1 + $0x9c] sm:$0xf]
      %v376 = vld [vmem:[%s1 + $0xa0] sm:$0xf]
      %v377 = vld [vmem:[%s1 + $0xa4] sm:$0xf]
      %v378 = vld [vmem:[%s1 + $0xa8] sm:$0xf]
      %v379 = vld [vmem:[%s1 + $0xac] sm:$0xf]
      %v380 = vld [vmem:[%s1 + $0xb0] sm:$0xf]
      %v381 = vld [vmem:[%s1 + $0xb4] sm:$0xf]
      %v382 = vld [vmem:[%s1 + $0xb8] sm:$0xf]
      %v383 = vld [vmem:[%s1 + $0xbc] sm:$0xf]
      %v384 = vld [vmem:[%s1 + $0xc0] sm:$0xf]
      %v385 = vld [vmem:[%s1 + $0xc4] sm:$0xf]
      %v386 = vld [vmem:[%s1 + $0xc8] sm:$0xf]
      %v387 = vld [vmem:[%s1 + $0xcc] sm:$0xf]
      %v388 = vld [vmem:[%s1 + $0xd0] sm:$0xf]
      %v389 = vld [vmem:[%s1 + $0xd4] sm:$0xf]
      %v390 = vld [vmem:[%s1 + $0xd8] sm:$0xf]
      %v391 = vld [vmem:[%s1 + $0xdc] sm:$0xf]
      %v392 = vld [vmem:[%s1 + $0xe0] sm:$0xf]
      %v393 = vld [vmem:[%s1 + $0xe4] sm:$0xf]
      %v394 = vld [vmem:[%s1 + $0xe8] sm:$0xf]
      %v395 = vld [vmem:[%s1 + $0xec] sm:$0xf]
      %v396 = vld [vmem:[%s1 + $0xf0] sm:$0xf]
      %v397 = vld [vmem:[%s1 + $0xf4] sm:$0xf]
      %v398 = vld [vmem:[%s1 + $0xf8] sm:$0xf]
      %v399 = vld [vmem:[%s1 + $0xfc] sm:$0xf]
      %v400 = vld [vmem:[%s1 + $0x100] sm:$0xf]
      %v401 = vld [vmem:[%s1 + $0x104] sm:$0xf]
      %v402 = vld [vmem:[%s1 + $0x108] sm:$0xf]
      %v403 = vld [vmem:[%s1 + $0x10c] sm:$0xf]
      %v404 = vld [vmem:[%s1 + $0x110] sm:$0xf]
      %v405 = vld [vmem:[%s1 + $0x114] sm:$0xf]
      %v406 = vld [vmem:[%s1 + $0x118] sm:$0xf]
      %v407 = vld [vmem:[%s1 + $0x11c] sm:$0xf]
      %v408 = vld [vmem:[%s1 + $0x120] sm:$0xf]
      %v409 = vld [vmem:[%s1 + $0x124] sm:$0xf]
      %v410 = vld [vmem:[%s1 + $0x128] sm:$0xf]
      %v411 = vld [vmem:[%s1 + $0x12c] sm:$0xf]
      %v412 = vld [vmem:[%s1 + $0x130] sm:$0xf]
      %v413 = vld [vmem:[%s1 + $0x134] sm:$0xf]
      %v414 = vld [vmem:[%s1 + $0x138] sm:$0xf]
      %v415 = vld [vmem:[%s1 + $0x13c] sm:$0xf]
      %v416 = vld [vmem:[%s1 + $0x140] sm:$0xf]
      %v417 = vld [vmem:[%s1 + $0x144] sm:$0xf]
      %v418 = vld [vmem:[%s1 + $0x148] sm:$0xf]
      %v419 = vld [vmem:[%s1 + $0x14c] sm:$0xf]
      %v420 = vld [vmem:[%s1 + $0x150] sm:$0xf]
      %v421 = vld [vmem:[%s1 + $0x154] sm:$0xf]
      %v422 = vld [vmem:[%s1 + $0x158] sm:$0xf]
      %v423 = vld [vmem:[%s1 + $0x15c] sm:$0xf]
      %v424 = vld [vmem:[%s1 + $0x160] sm:$0xf]
      %v425 = vld [vmem:[%s1 + $0x164] sm:$0xf]
      %v426 = vld [vmem:[%s1 + $0x168] sm:$0xf]
      %v427 = vld [vmem:[%s1 + $0x16c] sm:$0xf]
      %v428 = vld [vmem:[%s1 + $0x170] sm:$0xf]
      %v429 = vld [vmem:[%s1 + $0x174] sm:$0xf]
      %v430 = vld [vmem:[%s1 + $0x178] sm:$0xf]
      %v431 = vld [vmem:[%s1 + $0x17c] sm:$0xf]
      %v432 = vld [vmem:[%s1 + $0x180] sm:$0xf]
      %v433 = vld [vmem:[%s1 + $0x184] sm:$0xf]
      %v434 = vld [vmem:[%s1 + $0x188] sm:$0xf]
      %v435 = vld [vmem:[%s1 + $0x18c] sm:$0xf]
      %v436 = vld [vmem:[%s1 + $0x190] sm:$0xf]
      %v437 = vld [vmem:[%s1 + $0x194] sm:$0xf]
      %v438 = vld [vmem:[%s1 + $0x198] sm:$0xf]
      %v439 = vld [vmem:[%s1 + $0x19c] sm:$0xf]
      %v440 = vld [vmem:[%s1 + $0x1a0] sm:$0xf]
      %v441 = vld [vmem:[%s1 + $0x1a4] sm:$0xf]
      %v442 = vld [vmem:[%s1 + $0x1a8] sm:$0xf]
      %v443 = vld [vmem:[%s1 + $0x1ac] sm:$0xf]
      %v444 = vld [vmem:[%s1 + $0x1b0] sm:$0xf]
      %v445 = vld [vmem:[%s1 + $0x1b4] sm:$0xf]
      %v446 = vld [vmem:[%s1 + $0x1b8] sm:$0xf]
      %v447 = vld [vmem:[%s1 + $0x1bc] sm:$0xf]
      %v448 = vld [vmem:[%s2] sm:$0x1]
      %v450 = vlaneseq
      %v451 = vshrl.u32 %v450, 7
      %v452 = vsub.s32 0, %v451
      %v453 = vrot.slane %v448, %v452
      %v459 = vunpack.c.l.b16 %v332
      %v460 = vunpack.c.h.b16 %v332
      %v461 = vunpack.c.l.b16 %v333
      %v462 = vunpack.c.h.b16 %v333
      %v463 = vunpack.c.l.b16 %v334
      %v464 = vunpack.c.h.b16 %v334
      %v465 = vunpack.c.l.b16 %v335
      %v466 = vpack.c.b16 %v459, %v459
      %v467 = vpack.c.b16 %v460, %v460
      %v468 = vpack.c.b16 %v461, %v461
      %v469 = vpack.c.b16 %v462, %v462
      %v470 = vpack.c.b16 %v463, %v463
      %v471 = vpack.c.b16 %v464, %v464
      %v472 = vpack.c.b16 %v465, %v465
      %v592 = vunpack.c.l.b16 %v336
      %v593 = vunpack.c.l.b16 %v337
      %v594 = vunpack.c.l.b16 %v338
      %v595 = vunpack.c.l.b16 %v339
      %v596 = vunpack.c.l.b16 %v340
      %v597 = vunpack.c.l.b16 %v341
      %v598 = vunpack.c.l.b16 %v342
      %v599 = vunpack.c.l.b16 %v343
      %v600 = vunpack.c.l.b16 %v344
      %v601 = vunpack.c.l.b16 %v345
      %v602 = vunpack.c.l.b16 %v346
      %v603 = vunpack.c.l.b16 %v347
      %v604 = vunpack.c.l.b16 %v348
      %v605 = vunpack.c.l.b16 %v349
      %v606 = vunpack.c.l.b16 %v350
      %v607 = vunpack.c.l.b16 %v351
      %v608 = vunpack.c.l.b16 %v352
      %v609 = vunpack.c.l.b16 %v353
      %v610 = vunpack.c.l.b16 %v354
      %v611 = vunpack.c.l.b16 %v355
      %v612 = vunpack.c.l.b16 %v356
      %v613 = vunpack.c.l.b16 %v357
      %v614 = vunpack.c.l.b16 %v358
      %v615 = vunpack.c.l.b16 %v359
      %v616 = vunpack.c.l.b16 %v360
      %v617 = vunpack.c.l.b16 %v361
      %v618 = vunpack.c.l.b16 %v362
      %v619 = vunpack.c.l.b16 %v363
      %v620 = vunpack.c.l.b16 %v364
      %v621 = vunpack.c.l.b16 %v365
      %v622 = vunpack.c.l.b16 %v366
      %v623 = vunpack.c.l.b16 %v367
      %v624 = vunpack.c.l.b16 %v368
      %v625 = vunpack.c.l.b16 %v369
      %v626 = vunpack.c.l.b16 %v370
      %v627 = vunpack.c.l.b16 %v371
      %v628 = vunpack.c.l.b16 %v372
      %v629 = vunpack.c.l.b16 %v373
      %v630 = vunpack.c.l.b16 %v374
      %v631 = vunpack.c.l.b16 %v375
      %v632 = vunpack.c.l.b16 %v376
      %v633 = vunpack.c.l.b16 %v377
      %v634 = vunpack.c.l.b16 %v378
      %v635 = vunpack.c.l.b16 %v379
      %v636 = vunpack.c.l.b16 %v380
      %v637 = vunpack.c.l.b16 %v381
      %v638 = vunpack.c.l.b16 %v382
      %v639 = vunpack.c.l.b16 %v383
      %v640 = vunpack.c.l.b16 %v384
      %v641 = vunpack.c.l.b16 %v385
      %v642 = vunpack.c.l.b16 %v386
      %v643 = vunpack.c.l.b16 %v387
      %v644 = vunpack.c.l.b16 %v388
      %v645 = vunpack.c.l.b16 %v389
      %v646 = vunpack.c.l.b16 %v390
      %v647 = vunpack.c.l.b16 %v391
      %v648 = vunpack.c.l.b16 %v392
      %v649 = vunpack.c.l.b16 %v393
      %v650 = vunpack.c.l.b16 %v394
      %v651 = vunpack.c.l.b16 %v395
      %v652 = vunpack.c.l.b16 %v396
      %v653 = vunpack.c.l.b16 %v397
      %v654 = vunpack.c.l.b16 %v398
      %v655 = vunpack.c.l.b16 %v399
      %v656 = vunpack.c.l.b16 %v400
      %v657 = vunpack.c.l.b16 %v401
      %v658 = vunpack.c.l.b16 %v402
      %v659 = vunpack.c.l.b16 %v403
      %v660 = vunpack.c.l.b16 %v404
      %v661 = vunpack.c.l.b16 %v405
      %v662 = vunpack.c.l.b16 %v406
      %v663 = vunpack.c.l.b16 %v407
      %v664 = vunpack.c.l.b16 %v408
      %v665 = vunpack.c.l.b16 %v409
      %v666 = vunpack.c.l.b16 %v410
      %v667 = vunpack.c.l.b16 %v411
      %v668 = vunpack.c.l.b16 %v412
      %v669 = vunpack.c.l.b16 %v413
      %v670 = vunpack.c.l.b16 %v414
      %v671 = vunpack.c.l.b16 %v415
      %v672 = vunpack.c.l.b16 %v416
      %v673 = vunpack.c.l.b16 %v417
      %v674 = vunpack.c.l.b16 %v418
      %v675 = vunpack.c.l.b16 %v419
      %v676 = vunpack.c.l.b16 %v420
      %v677 = vunpack.c.l.b16 %v421
      %v678 = vunpack.c.l.b16 %v422
      %v679 = vunpack.c.l.b16 %v423
      %v680 = vunpack.c.l.b16 %v424
      %v681 = vunpack.c.l.b16 %v425
      %v682 = vunpack.c.l.b16 %v426
      %v683 = vunpack.c.l.b16 %v427
      %v684 = vunpack.c.l.b16 %v428
      %v685 = vunpack.c.l.b16 %v429
      %v686 = vunpack.c.l.b16 %v430
      %v687 = vunpack.c.l.b16 %v431
      %v688 = vunpack.c.l.b16 %v432
      %v689 = vunpack.c.l.b16 %v433
      %v690 = vunpack.c.l.b16 %v434
      %v691 = vunpack.c.l.b16 %v435
      %v692 = vunpack.c.l.b16 %v436
      %v693 = vunpack.c.l.b16 %v437
      %v694 = vunpack.c.l.b16 %v438
      %v695 = vunpack.c.l.b16 %v439
      %v696 = vunpack.c.l.b16 %v440
      %v697 = vunpack.c.l.b16 %v441
      %v698 = vunpack.c.l.b16 %v442
      %v699 = vunpack.c.l.b16 %v443
      %v700 = vunpack.c.l.b16 %v444
      %v701 = vunpack.c.l.b16 %v445
      %v702 = vunpack.c.l.b16 %v446
      %v703 = vunpack.c.l.b16 %v447
      %v704 = vpack.c.b16 %v593, %v592
      %v705 = vpack.c.b16 %v595, %v594
      %v706 = vpack.c.b16 %v597, %v596
      %v707 = vpack.c.b16 %v599, %v598
      %v708 = vpack.c.b16 %v601, %v600
      %v709 = vpack.c.b16 %v603, %v602
      %v710 = vpack.c.b16 %v605, %v604
      %v711 = vpack.c.b16 %v607, %v606
      %v712 = vpack.c.b16 %v609, %v608
      %v713 = vpack.c.b16 %v611, %v610
      %v714 = vpack.c.b16 %v613, %v612
      %v715 = vpack.c.b16 %v615, %v614
      %v716 = vpack.c.b16 %v617, %v616
      %v717 = vpack.c.b16 %v619, %v618
      %v718 = vpack.c.b16 %v621, %v620
      %v719 = vpack.c.b16 %v623, %v622
      %v720 = vpack.c.b16 %v625, %v624
      %v721 = vpack.c.b16 %v627, %v626
      %v722 = vpack.c.b16 %v629, %v628
      %v723 = vpack.c.b16 %v631, %v630
      %v724 = vpack.c.b16 %v633, %v632
      %v725 = vpack.c.b16 %v635, %v634
      %v726 = vpack.c.b16 %v637, %v636
      %v727 = vpack.c.b16 %v639, %v638
      %v728 = vpack.c.b16 %v641, %v640
      %v729 = vpack.c.b16 %v643, %v642
      %v730 = vpack.c.b16 %v645, %v644
      %v731 = vpack.c.b16 %v647, %v646
      %v732 = vpack.c.b16 %v649, %v648
      %v733 = vpack.c.b16 %v651, %v650
      %v734 = vpack.c.b16 %v653, %v652
      %v735 = vpack.c.b16 %v655, %v654
      %v736 = vpack.c.b16 %v657, %v656
      %v737 = vpack.c.b16 %v659, %v658
      %v738 = vpack.c.b16 %v661, %v660
      %v739 = vpack.c.b16 %v663, %v662
      %v740 = vpack.c.b16 %v665, %v664
      %v741 = vpack.c.b16 %v667, %v666
      %v742 = vpack.c.b16 %v669, %v668
      %v743 = vpack.c.b16 %v671, %v670
      %v744 = vpack.c.b16 %v673, %v672
      %v745 = vpack.c.b16 %v675, %v674
      %v746 = vpack.c.b16 %v677, %v676
      %v747 = vpack.c.b16 %v679, %v678
      %v748 = vpack.c.b16 %v681, %v680
      %v749 = vpack.c.b16 %v683, %v682
      %v750 = vpack.c.b16 %v685, %v684
      %v751 = vpack.c.b16 %v687, %v686
      %v752 = vpack.c.b16 %v689, %v688
      %v753 = vpack.c.b16 %v691, %v690
      %v754 = vpack.c.b16 %v693, %v692
      %v755 = vpack.c.b16 %v695, %v694
      %v756 = vpack.c.b16 %v697, %v696
      %v757 = vpack.c.b16 %v699, %v698
      %v758 = vpack.c.b16 %v701, %v700
      %v759 = vpack.c.b16 %v703, %v702
      %816 = vmatprep.subr.bf16.mxu0 0
      %817 = vmatpush1.bf16.msra.mxu0 %v704
      %818 = vmatprep.subr.bf16.mxu0 0
      %819 = vmatpush1.bf16.msra.mxu0 %v705
      %820 = vmatprep.subr.bf16.mxu0 0
      %821 = vmatpush1.bf16.msra.mxu0 %v706
      %822 = vmatprep.subr.bf16.mxu0 0
      %823 = vmatpush1.bf16.msra.mxu0 %v707
      %824 = vmatprep.subr.bf16.mxu0 0
      %825 = vmatpush1.bf16.msra.mxu0 %v708
      %826 = vmatprep.subr.bf16.mxu0 0
      %827 = vmatpush1.bf16.msra.mxu0 %v709
      %828 = vmatprep.subr.bf16.mxu0 0
      %829 = vmatpush1.bf16.msra.mxu0 %v710
      %830 = vmatprep.subr.bf16.mxu0 0
      %831 = vmatpush1.bf16.msra.mxu0 %v711
      %832 = vmatprep.subr.bf16.mxu0 0
      %833 = vmatpush1.bf16.msra.mxu0 %v712
      %834 = vmatprep.subr.bf16.mxu0 0
      %835 = vmatpush1.bf16.msra.mxu0 %v713
      %836 = vmatprep.subr.bf16.mxu0 0
      %837 = vmatpush1.bf16.msra.mxu0 %v714
      %838 = vmatprep.subr.bf16.mxu0 0
      %839 = vmatpush1.bf16.msra.mxu0 %v715
      %840 = vmatprep.subr.bf16.mxu0 0
      %841 = vmatpush1.bf16.msra.mxu0 %v716
      %842 = vmatprep.subr.bf16.mxu0 0
      %843 = vmatpush1.bf16.msra.mxu0 %v717
      %844 = vmatprep.subr.bf16.mxu0 0
      %845 = vmatpush1.bf16.msra.mxu0 %v718
      %846 = vmatprep.subr.bf16.mxu0 0
      %847 = vmatpush1.bf16.msra.mxu0 %v719
      %848 = vmatprep.mubr.bf16.mxu0 %v467
      %849 = vmatmul.mubr.bf16.gmra.mrb[0].mxu0 %v466
      %v850 = vpop.f32.mrb[0].mxu0
      %v851 = vadd.f32 %v453, %v850
      %v852 = vpop.f32.mrb[0].mxu0
      %v853 = vpop.f32.mrb[0].mxu0
      %v854 = vpop.f32.mrb[0].mxu0
      %855 = vdwg.mxu0
      %856 = vmatprep.subr.bf16.mxu0 0
      %857 = vmatpush1.bf16.msra.mxu0 %v720
      %858 = vmatprep.subr.bf16.mxu0 0
      %859 = vmatpush1.bf16.msra.mxu0 %v721
      %860 = vmatprep.subr.bf16.mxu0 0
      %861 = vmatpush1.bf16.msra.mxu0 %v722
      %862 = vmatprep.subr.bf16.mxu0 0
      %863 = vmatpush1.bf16.msra.mxu0 %v723
      %864 = vmatprep.subr.bf16.mxu0 0
      %865 = vmatpush1.bf16.msra.mxu0 %v724
      %866 = vmatprep.subr.bf16.mxu0 0
      %867 = vmatpush1.bf16.msra.mxu0 %v725
      %868 = vmatprep.subr.bf16.mxu0 0
      %869 = vmatpush1.bf16.msra.mxu0 %v726
      %870 = vmatprep.subr.bf16.mxu0 0
      %871 = vmatpush1.bf16.msra.mxu0 %v727
      %872 = vmatprep.subr.bf16.mxu0 0
      %873 = vmatpush1.bf16.msra.mxu0 %v728
      %874 = vmatprep.subr.bf16.mxu0 0
      %875 = vmatpush1.bf16.msra.mxu0 %v729
      %876 = vmatprep.subr.bf16.mxu0 0
      %877 = vmatpush1.bf16.msra.mxu0 %v730
      %878 = vmatprep.subr.bf16.mxu0 0
      %879 = vmatpush1.bf16.msra.mxu0 %v731
      %880 = vmatprep.subr.bf16.mxu0 0
      %881 = vmatpush1.bf16.msra.mxu0 %v732
      %882 = vmatprep.subr.bf16.mxu0 0
      %883 = vmatpush1.bf16.msra.mxu0 %v733
      %884 = vmatprep.subr.bf16.mxu0 0
      %885 = vmatpush1.bf16.msra.mxu0 %v734
      %886 = vmatprep.subr.bf16.mxu0 0
      %887 = vmatpush1.bf16.msra.mxu0 %v735
      %888 = vmatprep.mubr.bf16.mxu0 %v469
      %889 = vmatmul.mubr.bf16.gmra.mrb[0].mxu0 %v468
      %v890 = vpop.f32.mrb[0].mxu0
      %v891 = vadd.f32 %v851, %v890
      %v892 = vpop.f32.mrb[0].mxu0
      %v893 = vpop.f32.mrb[0].mxu0
      %v894 = vpop.f32.mrb[0].mxu0
      %895 = vdwg.mxu0
      %896 = vmatprep.subr.bf16.mxu0 0
      %897 = vmatpush1.bf16.msra.mxu0 %v736
      %898 = vmatprep.subr.bf16.mxu0 0
      %899 = vmatpush1.bf16.msra.mxu0 %v737
      %900 = vmatprep.subr.bf16.mxu0 0
      %901 = vmatpush1.bf16.msra.mxu0 %v738
      %902 = vmatprep.subr.bf16.mxu0 0
      %903 = vmatpush1.bf16.msra.mxu0 %v739
      %904 = vmatprep.subr.bf16.mxu0 0
      %905 = vmatpush1.bf16.msra.mxu0 %v740
      %906 = vmatprep.subr.bf16.mxu0 0
      %907 = vmatpush1.bf16.msra.mxu0 %v741
      %908 = vmatprep.subr.bf16.mxu0 0
      %909 = vmatpush1.bf16.msra.mxu0 %v742
      %910 = vmatprep.subr.bf16.mxu0 0
      %911 = vmatpush1.bf16.msra.mxu0 %v743
      %912 = vmatprep.subr.bf16.mxu0 0
      %913 = vmatpush1.bf16.msra.mxu0 %v744
      %914 = vmatprep.subr.bf16.mxu0 0
      %915 = vmatpush1.bf16.msra.mxu0 %v745
      %916 = vmatprep.subr.bf16.mxu0 0
      %917 = vmatpush1.bf16.msra.mxu0 %v746
      %918 = vmatprep.subr.bf16.mxu0 0
      %919 = vmatpush1.bf16.msra.mxu0 %v747
      %920 = vmatprep.subr.bf16.mxu0 0
      %921 = vmatpush1.bf16.msra.mxu0 %v748
      %922 = vmatprep.subr.bf16.mxu0 0
      %923 = vmatpush1.bf16.msra.mxu0 %v749
      %924 = vmatprep.subr.bf16.mxu0 0
      %925 = vmatpush1.bf16.msra.mxu0 %v750
      %926 = vmatprep.subr.bf16.mxu0 0
      %927 = vmatpush1.bf16.msra.mxu0 %v751
      %928 = vmatprep.mubr.bf16.mxu0 %v471
      %929 = vmatmul.mubr.bf16.gmra.mrb[0].mxu0 %v470
      %v930 = vpop.f32.mrb[0].mxu0
      %v931 = vadd.f32 %v891, %v930
      %v932 = vpop.f32.mrb[0].mxu0
      %v933 = vpop.f32.mrb[0].mxu0
      %v934 = vpop.f32.mrb[0].mxu0
      %935 = vdwg.mxu0
      %936 = vmatprep.subr.bf16.mxu0 0
      %937 = vmatpush1.bf16.msra.mxu0 %v752
      %938 = vmatprep.subr.bf16.mxu0 0
      %939 = vmatpush1.bf16.msra.mxu0 %v753
      %940 = vmatprep.subr.bf16.mxu0 0
      %941 = vmatpush1.bf16.msra.mxu0 %v754
      %942 = vmatprep.subr.bf16.mxu0 0
      %943 = vmatpush1.bf16.msra.mxu0 %v755
      %944 = vmatprep.subr.bf16.mxu0 0
      %945 = vmatpush1.bf16.msra.mxu0 %v756
      %946 = vmatprep.subr.bf16.mxu0 0
      %947 = vmatpush1.bf16.msra.mxu0 %v757
      %948 = vmatprep.subr.bf16.mxu0 0
      %949 = vmatpush1.bf16.msra.mxu0 %v758
      %950 = vmatprep.subr.bf16.mxu0 0
      %951 = vmatpush1.bf16.msra.mxu0 %v759
      %952 = vmatprep.subr.bf16.mxu0 0
      %953 = vmatpush1.bf16.msra.mxu0 0
      %954 = vmatprep.subr.bf16.mxu0 0
      %955 = vmatpush1.bf16.msra.mxu0 0
      %956 = vmatprep.subr.bf16.mxu0 0
      %957 = vmatpush1.bf16.msra.mxu0 0
      %958 = vmatprep.subr.bf16.mxu0 0
      %959 = vmatpush1.bf16.msra.mxu0 0
      %960 = vmatprep.subr.bf16.mxu0 0
      %961 = vmatpush1.bf16.msra.mxu0 0
      %962 = vmatprep.subr.bf16.mxu0 0
      %963 = vmatpush1.bf16.msra.mxu0 0
      %964 = vmatprep.subr.bf16.mxu0 0
      %965 = vmatpush1.bf16.msra.mxu0 0
      %966 = vmatprep.subr.bf16.mxu0 0
      %967 = vmatpush1.bf16.msra.mxu0 0
      %968 = vmatprep.mubr.bf16.mxu0 0
      %969 = vmatmul.mubr.bf16.gmra.mrb[0].mxu0 %v472
      %v970 = vpop.f32.mrb[0].mxu0
      %v971 = vadd.f32 %v931, %v970
      %v972 = vpop.f32.mrb[0].mxu0
      %v973 = vpop.f32.mrb[0].mxu0
      %v974 = vpop.f32.mrb[0].mxu0
      %975 = vdwg.mxu0
      %v976 = vmax.f32 %v971, 0.0
      %v977 = vpack.c.bf16 %v976, %v976
      %v978 = vld [vmem:[%s3] sm:$0xf]
      %v979 = vld [vmem:[%s3 + $0x4] sm:$0xf]
      %v980 = vld [vmem:[%s3 + $0x8] sm:$0xf]
      %v981 = vld [vmem:[%s3 + $0xc] sm:$0xf]
      %v982 = vld [vmem:[%s3 + $0x10] sm:$0xf]
      %v983 = vld [vmem:[%s3 + $0x14] sm:$0xf]
      %v984 = vld [vmem:[%s3 + $0x18] sm:$0xf]
      %v985 = vld [vmem:[%s3 + $0x1c] sm:$0xf]
      %v986 = vld [vmem:[%s3 + $0x20] sm:$0xf]
      %v987 = vld [vmem:[%s3 + $0x24] sm:$0xf]
      %v988 = vld [vmem:[%s3 + $0x28] sm:$0xf]
      %v989 = vld [vmem:[%s3 + $0x2c] sm:$0xf]
      %v990 = vld [vmem:[%s3 + $0x30] sm:$0xf]
      %v991 = vld [vmem:[%s3 + $0x34] sm:$0xf]
      %v992 = vld [vmem:[%s3 + $0x38] sm:$0xf]
      %v993 = vld [vmem:[%s3 + $0x3c] sm:$0xf]
      %v994 = vld [vmem:[%s4] sm:$0x1]
      %v996 = vlaneseq
      %v997 = vshrl.u32 %v996, 7
      %v998 = vsub.s32 0, %v997
      %v999 = vrot.slane %v994, %v998
      %v1017 = vunpack.c.l.b16 %v978
      %v1018 = vunpack.c.l.b16 %v979
      %v1019 = vunpack.c.l.b16 %v980
      %v1020 = vunpack.c.l.b16 %v981
      %v1021 = vunpack.c.l.b16 %v982
      %v1022 = vunpack.c.l.b16 %v983
      %v1023 = vunpack.c.l.b16 %v984
      %v1024 = vunpack.c.l.b16 %v985
      %v1025 = vunpack.c.l.b16 %v986
      %v1026 = vunpack.c.l.b16 %v987
      %v1027 = vunpack.c.l.b16 %v988
      %v1028 = vunpack.c.l.b16 %v989
      %v1029 = vunpack.c.l.b16 %v990
      %v1030 = vunpack.c.l.b16 %v991
      %v1031 = vunpack.c.l.b16 %v992
      %v1032 = vunpack.c.l.b16 %v993
      %v1033 = vpack.c.b16 %v1018, %v1017
      %v1034 = vpack.c.b16 %v1020, %v1019
      %v1035 = vpack.c.b16 %v1022, %v1021
      %v1036 = vpack.c.b16 %v1024, %v1023
      %v1037 = vpack.c.b16 %v1026, %v1025
      %v1038 = vpack.c.b16 %v1028, %v1027
      %v1039 = vpack.c.b16 %v1030, %v1029
      %v1040 = vpack.c.b16 %v1032, %v1031
      %1049 = vmatprep.subr.bf16.mxu0 0
      %1050 = vmatpush1.bf16.msra.mxu0 %v1033
      %1051 = vmatprep.subr.bf16.mxu0 0
      %1052 = vmatpush1.bf16.msra.mxu0 %v1034
      %1053 = vmatprep.subr.bf16.mxu0 0
      %1054 = vmatpush1.bf16.msra.mxu0 %v1035
      %1055 = vmatprep.subr.bf16.mxu0 0
      %1056 = vmatpush1.bf16.msra.mxu0 %v1036
      %1057 = vmatprep.subr.bf16.mxu0 0
      %1058 = vmatpush1.bf16.msra.mxu0 %v1037
      %1059 = vmatprep.subr.bf16.mxu0 0
      %1060 = vmatpush1.bf16.msra.mxu0 %v1038
      %1061 = vmatprep.subr.bf16.mxu0 0
      %1062 = vmatpush1.bf16.msra.mxu0 %v1039
      %1063 = vmatprep.subr.bf16.mxu0 0
      %1064 = vmatpush1.bf16.msra.mxu0 %v1040
      %1065 = vmatprep.subr.bf16.mxu0 0
      %1066 = vmatpush1.bf16.msra.mxu0 0
      %1067 = vmatprep.subr.bf16.mxu0 0
      %1068 = vmatpush1.bf16.msra.mxu0 0
      %1069 = vmatprep.subr.bf16.mxu0 0
      %1070 = vmatpush1.bf16.msra.mxu0 0
      %1071 = vmatprep.subr.bf16.mxu0 0
      %1072 = vmatpush1.bf16.msra.mxu0 0
      %1073 = vmatprep.subr.bf16.mxu0 0
      %1074 = vmatpush1.bf16.msra.mxu0 0
      %1075 = vmatprep.subr.bf16.mxu0 0
      %1076 = vmatpush1.bf16.msra.mxu0 0
      %1077 = vmatprep.subr.bf16.mxu0 0
      %1078 = vmatpush1.bf16.msra.mxu0 0
      %1079 = vmatprep.subr.bf16.mxu0 0
      %1080 = vmatpush1.bf16.msra.mxu0 0
      %1081 = vmatprep.mubr.bf16.mxu0 0
      %1082 = vmatmul.mubr.bf16.gmra.mrb[0].mxu0 %v977
      %v1083 = vpop.f32.mrb[0].mxu0
      %v1084 = vadd.f32 %v999, %v1083
      %v1085 = vpop.f32.mrb[0].mxu0
      %v1086 = vpop.f32.mrb[0].mxu0
      %v1087 = vpop.f32.mrb[0].mxu0
      %1088 = vdwg.mxu0
      %v1089 = vmax.f32 %v1084, 0.0
      %v1090 = vpack.c.bf16 %v1089, %v1089
      %v1091 = vld [vmem:[%s5] sm:$0xf]
      %v1092 = vld [vmem:[%s5 + $0x4] sm:$0xf]
      %v1093 = vld [vmem:[%s5 + $0x8] sm:$0xf]
      %v1094 = vld [vmem:[%s5 + $0xc] sm:$0xf]
      %v1095 = vld [vmem:[%s5 + $0x10] sm:$0xf]
      %v1096 = vld [vmem:[%s5 + $0x14] sm:$0xf]
      %v1097 = vld [vmem:[%s5 + $0x18] sm:$0xf]
      %v1098 = vld [vmem:[%s5 + $0x1c] sm:$0xf]
      %v1099 = vld [vmem:[%s5 + $0x20] sm:$0xf]
      %v1100 = vld [vmem:[%s5 + $0x24] sm:$0xf]
      %v1101 = vld [vmem:[%s5 + $0x28] sm:$0xf]
      %v1102 = vld [vmem:[%s5 + $0x2c] sm:$0xf]
      %v1103 = vld [vmem:[%s5 + $0x30] sm:$0xf]
      %v1104 = vld [vmem:[%s5 + $0x34] sm:$0xf]
      %v1105 = vld [vmem:[%s5 + $0x38] sm:$0xf]
      %v1106 = vld [vmem:[%s5 + $0x3c] sm:$0xf]
      %v1107 = vld [vmem:[%s6] sm:$0x1]
      %v1109 = vlaneseq
      %v1110 = vshrl.u32 %v1109, 7
      %v1111 = vsub.s32 0, %v1110
      %v1112 = vrot.slane %v1107, %v1111
      %v1130 = vunpack.c.l.b16 %v1091
      %v1131 = vunpack.c.l.b16 %v1092
      %v1132 = vunpack.c.l.b16 %v1093
      %v1133 = vunpack.c.l.b16 %v1094
      %v1134 = vunpack.c.l.b16 %v1095
      %v1135 = vunpack.c.l.b16 %v1096
      %v1136 = vunpack.c.l.b16 %v1097
      %v1137 = vunpack.c.l.b16 %v1098
      %v1138 = vunpack.c.l.b16 %v1099
      %v1139 = vunpack.c.l.b16 %v1100
      %v1140 = vunpack.c.l.b16 %v1101
      %v1141 = vunpack.c.l.b16 %v1102
      %v1142 = vunpack.c.l.b16 %v1103
      %v1143 = vunpack.c.l.b16 %v1104
      %v1144 = vunpack.c.l.b16 %v1105
      %v1145 = vunpack.c.l.b16 %v1106
      %v1146 = vpack.c.b16 %v1131, %v1130
      %v1147 = vpack.c.b16 %v1133, %v1132
      %v1148 = vpack.c.b16 %v1135, %v1134
      %v1149 = vpack.c.b16 %v1137, %v1136
      %v1150 = vpack.c.b16 %v1139, %v1138
      %v1151 = vpack.c.b16 %v1141, %v1140
      %v1152 = vpack.c.b16 %v1143, %v1142
      %v1153 = vpack.c.b16 %v1145, %v1144
      %1162 = vmatprep.subr.bf16.mxu0 0
      %1163 = vmatpush1.bf16.msra.mxu0 %v1146
      %1164 = vmatprep.subr.bf16.mxu0 0
      %1165 = vmatpush1.bf16.msra.mxu0 %v1147
      %1166 = vmatprep.subr.bf16.mxu0 0
      %1167 = vmatpush1.bf16.msra.mxu0 %v1148
      %1168 = vmatprep.subr.bf16.mxu0 0
      %1169 = vmatpush1.bf16.msra.mxu0 %v1149
      %1170 = vmatprep.subr.bf16.mxu0 0
      %1171 = vmatpush1.bf16.msra.mxu0 %v1150
      %1172 = vmatprep.subr.bf16.mxu0 0
      %1173 = vmatpush1.bf16.msra.mxu0 %v1151
      %1174 = vmatprep.subr.bf16.mxu0 0
      %1175 = vmatpush1.bf16.msra.mxu0 %v1152
      %1176 = vmatprep.subr.bf16.mxu0 0
      %1177 = vmatpush1.bf16.msra.mxu0 %v1153
      %1178 = vmatprep.subr.bf16.mxu0 0
      %1179 = vmatpush1.bf16.msra.mxu0 0
      %1180 = vmatprep.subr.bf16.mxu0 0
      %1181 = vmatpush1.bf16.msra.mxu0 0
      %1182 = vmatprep.subr.bf16.mxu0 0
      %1183 = vmatpush1.bf16.msra.mxu0 0
      %1184 = vmatprep.subr.bf16.mxu0 0
      %1185 = vmatpush1.bf16.msra.mxu0 0
      %1186 = vmatprep.subr.bf16.mxu0 0
      %1187 = vmatpush1.bf16.msra.mxu0 0
      %1188 = vmatprep.subr.bf16.mxu0 0
      %1189 = vmatpush1.bf16.msra.mxu0 0
      %1190 = vmatprep.subr.bf16.mxu0 0
      %1191 = vmatpush1.bf16.msra.mxu0 0
      %1192 = vmatprep.subr.bf16.mxu0 0
      %1193 = vmatpush1.bf16.msra.mxu0 0
      %1194 = vmatprep.mubr.bf16.mxu0 0
      %1195 = vmatmul.mubr.bf16.gmra.mrb[0].mxu0 %v1090
      %v1196 = vpop.f32.mrb[0].mxu0
      %v1197 = vadd.f32 %v1112, %v1196
      %v1198 = vpop.f32.mrb[0].mxu0
      %v1199 = vpop.f32.mrb[0].mxu0
      %v1200 = vpop.f32.mrb[0].mxu0
      %1201 = vdwg.mxu0
      %v1202 = vmax.f32 %v1197, 0.0
      %v1203 = vpack.c.bf16 %v1202, %v1202
      %v1204 = vld [vmem:[%s7] sm:$0xf]
      %v1205 = vld [vmem:[%s7 + $0x4] sm:$0xf]
      %v1206 = vld [vmem:[%s7 + $0x8] sm:$0xf]
      %v1207 = vld [vmem:[%s7 + $0xc] sm:$0xf]
      %v1208 = vld [vmem:[%s7 + $0x10] sm:$0xf]
      %v1209 = vld [vmem:[%s7 + $0x14] sm:$0xf]
      %v1210 = vld [vmem:[%s7 + $0x18] sm:$0xf]
      %v1211 = vld [vmem:[%s7 + $0x1c] sm:$0xf]
      %v1212 = vld [vmem:[%s7 + $0x20] sm:$0xf]
      %v1213 = vld [vmem:[%s7 + $0x24] sm:$0xf]
      %v1214 = vld [vmem:[%s7 + $0x28] sm:$0xf]
      %v1215 = vld [vmem:[%s7 + $0x2c] sm:$0xf]
      %v1216 = vld [vmem:[%s7 + $0x30] sm:$0xf]
      %v1217 = vld [vmem:[%s7 + $0x34] sm:$0xf]
      %v1218 = vld [vmem:[%s7 + $0x38] sm:$0xf]
      %v1219 = vld [vmem:[%s7 + $0x3c] sm:$0xf]
      %v1220 = vld [vmem:[%s8] sm:$0x1]
      %v1222 = vlaneseq
      %v1223 = vshrl.u32 %v1222, 7
      %v1224 = vsub.s32 0, %v1223
      %v1225 = vrot.slane %v1220, %v1224
      %v1243 = vunpack.c.l.b16 %v1204
      %v1244 = vunpack.c.l.b16 %v1205
      %v1245 = vunpack.c.l.b16 %v1206
      %v1246 = vunpack.c.l.b16 %v1207
      %v1247 = vunpack.c.l.b16 %v1208
      %v1248 = vunpack.c.l.b16 %v1209
      %v1249 = vunpack.c.l.b16 %v1210
      %v1250 = vunpack.c.l.b16 %v1211
      %v1251 = vunpack.c.l.b16 %v1212
      %v1252 = vunpack.c.l.b16 %v1213
      %v1253 = vunpack.c.l.b16 %v1214
      %v1254 = vunpack.c.l.b16 %v1215
      %v1255 = vunpack.c.l.b16 %v1216
      %v1256 = vunpack.c.l.b16 %v1217
      %v1257 = vunpack.c.l.b16 %v1218
      %v1258 = vunpack.c.l.b16 %v1219
      %v1259 = vpack.c.b16 %v1244, %v1243
      %v1260 = vpack.c.b16 %v1246, %v1245
      %v1261 = vpack.c.b16 %v1248, %v1247
      %v1262 = vpack.c.b16 %v1250, %v1249
      %v1263 = vpack.c.b16 %v1252, %v1251
      %v1264 = vpack.c.b16 %v1254, %v1253
      %v1265 = vpack.c.b16 %v1256, %v1255
      %v1266 = vpack.c.b16 %v1258, %v1257
      %1275 = vmatprep.subr.bf16.mxu0 0
      %1276 = vmatpush1.bf16.msra.mxu0 %v1259
      %1277 = vmatprep.subr.bf16.mxu0 0
      %1278 = vmatpush1.bf16.msra.mxu0 %v1260
      %1279 = vmatprep.subr.bf16.mxu0 0
      %1280 = vmatpush1.bf16.msra.mxu0 %v1261
      %1281 = vmatprep.subr.bf16.mxu0 0
      %1282 = vmatpush1.bf16.msra.mxu0 %v1262
      %1283 = vmatprep.subr.bf16.mxu0 0
      %1284 = vmatpush1.bf16.msra.mxu0 %v1263
      %1285 = vmatprep.subr.bf16.mxu0 0
      %1286 = vmatpush1.bf16.msra.mxu0 %v1264
      %1287 = vmatprep.subr.bf16.mxu0 0
      %1288 = vmatpush1.bf16.msra.mxu0 %v1265
      %1289 = vmatprep.subr.bf16.mxu0 0
      %1290 = vmatpush1.bf16.msra.mxu0 %v1266
      %1291 = vmatprep.subr.bf16.mxu0 0
      %1292 = vmatpush1.bf16.msra.mxu0 0
      %1293 = vmatprep.subr.bf16.mxu0 0
      %1294 = vmatpush1.bf16.msra.mxu0 0
      %1295 = vmatprep.subr.bf16.mxu0 0
      %1296 = vmatpush1.bf16.msra.mxu0 0
      %1297 = vmatprep.subr.bf16.mxu0 0
      %1298 = vmatpush1.bf16.msra.mxu0 0
      %1299 = vmatprep.subr.bf16.mxu0 0
      %1300 = vmatpush1.bf16.msra.mxu0 0
      %1301 = vmatprep.subr.bf16.mxu0 0
      %1302 = vmatpush1.bf16.msra.mxu0 0
      %1303 = vmatprep.subr.bf16.mxu0 0
      %1304 = vmatpush1.bf16.msra.mxu0 0
      %1305 = vmatprep.subr.bf16.mxu0 0
      %1306 = vmatpush1.bf16.msra.mxu0 0
      %1307 = vmatprep.mubr.bf16.mxu0 0
      %1308 = vmatmul.mubr.bf16.gmra.mrb[0].mxu0 %v1203
      %v1309 = vpop.f32.mrb[0].mxu0
      %v1310 = vadd.f32 %v1225, %v1309
      %v1311 = vpop.f32.mrb[0].mxu0
      %v1312 = vpop.f32.mrb[0].mxu0
      %v1313 = vpop.f32.mrb[0].mxu0
      %1314 = vdwg.mxu0
      %v1315 = vlaneseq
      %v1316 = vand.u32 %v1315, 127
      %vm1317 = vcmp.lt.s32.totalorder %v1316, 10
      %v1318 = vsel %vm1317, %v1310, -1e+30
      %1319 = vmax.xlane.f32.xlu0 %v1318
      %v1320 = vpop.xlane.xlu0 %1319
      %v1321 = vsub.f32 %v1310, %v1320
      %v1322 = vmul.f32 %v1321, 1.442695
      %v1323 = vpow.pop %v1322
      %v1324 = vsel %vm1317, %v1323, 0.0
      %1325 = vadd.xlane.f32.xlu0 %v1324
      %v1326 = vpop.xlane.xlu0 %1325
      %v1327 = vlog2.pop %v1326
      %v1328 = vmul.f32 %v1327, 0.6931472
      %v1329 = vsub.f32 %v1321, %v1328
      %v1330 = vsel %vm1317, %v1329, 0.0
      %1331 = vst [vmem:[%s330] sm:$0xff] %v1330
      %p1332 = scmp.lt.s32.totalorder %s20, 2
      %s1333 = scalar_select %p1332, %s20, 2
      %s1334 = smul.addr %s1333, 8
      %s1335 = scalar_lea.vmem %s9, %s1334
      // Predicated region
      $region57: #{neural_net_forward.1} parent=55 // pred_check
        %p1336 = pneg %p232
      $region58: #{neural_net_forward.1} parent=55 // pred_check_branch
        %1338 = sbr.rel (%p1336) target = $region60
      $region59: #{neural_net_forward.1} parent=55 // pred_region
        _
      $region60: #{neural_net_forward.1} parent=55 // pred_fallthru
        _
    $region56: #{neural_net_forward.1} parent=5 // pred_fallthru
      _
    %p1339 = scmp.le.s32.totalorder 2, %s15
    // Predicated region
    $region61: #{neural_net_forward.1} parent=5 // pred_check
      %p1340 = pneg %p1339
    $region62: #{neural_net_forward.1} parent=5 // pred_check_branch
      %1342 = sbr.rel (%p1340) target = $region64
    $region63: #{neural_net_forward.1} parent=5 // pred_region
      %s1343 = ssub.s32 %s15, 2
      // Predicated region
      $region65: #{neural_net_forward.1} parent=63 // pred_check
        %p1344 = pneg %p238
      $region66: #{neural_net_forward.1} parent=63 // pred_check_branch
        %1346 = sbr.rel (%p1344) target = $region68
      $region67: #{neural_net_forward.1} parent=63 // pred_region
        %p1347 = scmp.lt.s32.totalorder %s21, 2
        %s1348 = scalar_select %p1347, %s21, 2
        %s1349 = smul.addr %s1348, 8
        %s1350 = scalar_lea.vmem %s9, %s1349
      $region68: #{neural_net_forward.1} parent=63 // pred_fallthru
        _
    $region64: #{neural_net_forward.1} parent=5 // pred_fallthru
      _
  $region6: #{neural_net_forward.1} parent=0 // loop_footer
    %s19 = sadd.s32 1, %s15
  $region7: #{neural_net_forward.1} parent=0 // loop_footer_branch
    %14 = sbr.rel target = $region3
  $region8: #{neural_net_forward.1} parent=0 // loop_exit
    _

</llo_original>
